<compile_context>
chip_gen: v5e
topology: v5e:2x2
jax: 0.10.0
libtpu: 0.0.40
codegen_flags: <defaults>
</compile_context>

<pallas_src>
import numpy as np
import jax
import jax.numpy as jnp
from jax.experimental import pallas as pl
from jax.experimental.pallas import tpu as pltpu


def balanced_init(input_dim, hidden_dim, output_dim, seed=0):
    """SVD-based balanced init, identical math to the PyTorch version (deterministic)."""
    rng = np.random.RandomState(seed)
    dims = [input_dim, hidden_dim, output_dim]
    d0, dN = dims[0], dims[-1]
    min_d = min(d0, dN)
    variance = 5.3045
    A = rng.randn(dN, d0) * variance
    U, Sigma, Vt = np.linalg.svd(A, full_matrices=False)
    Sigma_power = np.power(np.diag(Sigma[:min_d]), 1.0 / (len(dims) - 1))
    W1 = np.zeros((hidden_dim, input_dim), dtype=np.float32)
    W2 = np.zeros((output_dim, hidden_dim), dtype=np.float32)
    W1[:min_d, :] = (Sigma_power @ Vt[:min_d, :]).astype(np.float32)
    W2[:min_d, :min_d] = (U[:, :min_d] @ Sigma_power).astype(np.float32)
    return jnp.asarray(W1), jnp.asarray(W2)


def _linear_net_kernel(w_ref, x_ref, o_ref):
    # Single MXU matmul with f32 accumulation on a lane-dense (batch-on-lanes)
    # x tile.  The fused weight tile is resident in VMEM across all grid steps.
    o_ref[...] = jnp.dot(
        w_ref[...], x_ref[...], preferred_element_type=jnp.float32
    ).astype(o_ref.dtype)


def _pick_batch_tile(n, tn_request):
    """Pick a lane-dense batch tile: multiple of 128, >=2 grid blocks when possible."""
    if n <= 128:
        return n  # single full-extent block (block dim == array dim is always legal)
    half_rounded = ((((n + 1) // 2) + 127) // 128) * 128
    return max(128, min(tn_request, half_rounded))


def linear_network_forward(w1, w2, x, *, tn=8192):
    """Compute W2 @ (W1 @ x) via the fused weight W = W2 @ W1.

    w1: (hidden_dim, input_dim)  w2: (output_dim, hidden_dim)  x: (input_dim, N)
    Returns (output_dim, N) float32.
    """
    hidden_dim, input_dim = w1.shape
    output_dim = w2.shape[0]
    n = x.shape[1]

    # One-time tiny fusion (16x64 @ 64x32 ~ 65 KFLOP) done outside the kernel.
    w = jnp.dot(w2, w1, preferred_element_type=jnp.float32)

    tn = _pick_batch_tile(n, tn)
    n_blocks = pl.cdiv(n, tn)

    flops = 2 * n * output_dim * input_dim
    bytes_accessed = 4 * (w.size + input_dim * n + output_dim * n)

    out = pl.pallas_call(
        _linear_net_kernel,
        out_shape=jax.ShapeDtypeStruct((output_dim, n), jnp.float32),
        grid_spec=pltpu.PrefetchScalarGridSpec(
            num_scalar_prefetch=0,
            grid=(n_blocks,),
            in_specs=[
                # Fused weight: constant block index -> resident in VMEM across steps.
                pl.BlockSpec((output_dim, input_dim), lambda j: (0, 0)),
                # x tile: features on sublanes, batch (lane-dense) on lanes.
                # Partial last block reads garbage lanes, which is safe because
                # batch columns are independent in this matmul.
                pl.BlockSpec((input_dim, tn), lambda j: (0, j)),
            ],
            out_specs=pl.BlockSpec((output_dim, tn), lambda j: (0, j)),
        ),
        compiler_params=pltpu.CompilerParams(
            dimension_semantics=("parallel",),
        ),
        cost_estimate=pl.CostEstimate(
            flops=flops, transcendentals=0, bytes_accessed=bytes_accessed
        ),
    )(w, x)

    return out


if __name__ == "__main__":
    # Small shapes consistent with the module: hidden > input > output.
    input_dim, hidden_dim, output_dim = 32, 64, 16
    batch_n = 200  # 2 grid blocks at tn=128, second one partial (exercises masking)

    W1, W2 = balanced_init(input_dim, hidden_dim, output_dim, seed=0)

    key = jax.random.PRNGKey(0)
    x = jax.random.normal(key, (input_dim, batch_n), dtype=jnp.float32)

    out = linear_network_forward(W1, W2, x)
    out = jax.block_until_ready(out)

    # Sanity check against the un-fused plain-JAX reference (same math as the
    # PyTorch forward); weight fusion only changes rounding order slightly.
    ref = W2 @ (W1 @ x)
    np.testing.assert_allclose(np.asarray(out), np.asarray(ref), rtol=1e-4, atol=1e-4)

    print("KERNEL_OK")
</pallas_src>

<mosaic_0001>
module attributes {stable_mosaic.version = 11 : i64} {
  func.func @_linear_net_kernel(%arg0: i32, %arg1: memref<16x32xf32, #tpu.memory_space<vmem>>, %arg2: memref<32x128xf32, #tpu.memory_space<vmem>>, %arg3: memref<16x128xf32, #tpu.memory_space<vmem>>) attributes {dimension_semantics = [#tpu.dimension_semantics<parallel>], iteration_bounds = array<i64: 2>, scalar_prefetch = 0 : i64, scratch_operands = 0 : i64, tpu.core_type = #tpu.core_type<tc>, window_params = [{pipeline_mode = #tpu.pipeline_mode<synchronous>, transform_indices = @transform_0, window_bounds = array<i64: 16, 32>}, {transform_indices = @transform_1, window_bounds = array<i64: 32, 128>}, {transform_indices = @transform_2, window_bounds = array<i64: 16, 128>}]} {
    %c0 = arith.constant 0 : index
    %c0_0 = arith.constant 0 : index
    %0 = vector.load %arg1[%c0, %c0_0] : memref<16x32xf32, #tpu.memory_space<vmem>>, vector<16x32xf32>
    %c0_1 = arith.constant 0 : index
    %c0_2 = arith.constant 0 : index
    %1 = vector.load %arg2[%c0_1, %c0_2] : memref<32x128xf32, #tpu.memory_space<vmem>>, vector<32x128xf32>
    %cst = arith.constant dense<0.000000e+00> : vector<16x128xf32>
    %2 = tpu.matmul %0, %1, %cst {dimension_numbers = #tpu.dot_dimension_numbers<[1], [0], [0], [1], [0, 0, 1, 1], [], []>} : vector<16x32xf32>, vector<32x128xf32>, vector<16x128xf32> -> vector<16x128xf32>
    %c0_3 = arith.constant 0 : index
    %c0_4 = arith.constant 0 : index
    %3 = vector.load %arg3[%c0_3, %c0_4] : memref<16x128xf32, #tpu.memory_space<vmem>>, vector<16x128xf32>
    tpu.vector_store %arg3[%c0_3, %c0_4], %2 {strides = array<i32>} : memref<16x128xf32, #tpu.memory_space<vmem>>, vector<16x128xf32>,
    return
  }
  func.func @transform_0(%arg0: i32) -> (i32, i32) {
    %c0_i32 = arith.constant 0 : i32
    %c0_i32_0 = arith.constant 0 : i32
    %c0_i32_1 = arith.constant 0 : i32
    return %c0_i32, %c0_i32_0 : i32, i32
  }
  func.func @transform_1(%arg0: i32) -> (i32, i32) {
    %c0_i32 = arith.constant 0 : i32
    %c0_i32_0 = arith.constant 0 : i32
    return %c0_i32, %arg0 : i32, i32
  }
  func.func @transform_2(%arg0: i32) -> (i32, i32) {
    %c0_i32 = arith.constant 0 : i32
    %c0_i32_0 = arith.constant 0 : i32
    return %c0_i32, %arg0 : i32, i32
  }
}

</mosaic_0001>

<llo_original>
// kernel: tpu_custom_call.1
$region0: #{tpu_custom_call.1}
  #allocation0 [shape = 'u32[]', space=smem, size = 0x4, offset = 0x4, fixed_abs, tag = 'smem constant byte address 0x4 - core index']
  #allocation1 [shape = 'u32[72,128]{1,0:T(1,128)}', space=vmem, size = 0x9000, scoped, tag = 'internal scratch']
  %s0 = inlined_call_operand.hbm [shape: f32[16,32], index: 0, kind: input, shape index: {}]
  %s1 = inlined_call_operand.hbm [shape: f32[32,200], index: 1, kind: input, shape index: {}]
  %s2 = inlined_call_operand.hbm [shape: f32[16,200], index: 2, kind: output, shape index: {}]
  %s3 = sld [smem:[#allocation0]]
  $region49: #{tpu_custom_call.1} parent=0
    _
  %s5 = ssub.s32 1, %s3
  %s6 = scalar_select 0, %s5, %s3
  $region1: #{tpu_custom_call.1} parent=0
    #allocation2 [shape = 'u8[8192]{0}', space=vmem, size = 0x2000, scoped, tag = 'input window, operand 0, single buffered']
    #allocation3 [shape = 's32[2]{0}', space=sflag, size = 0x8, scoped, tag = 'scoped memory for tpu_custom_call.1']
    #allocation4 [shape = 's32[2]{0}', space=sflag, size = 0x8, scoped, tag = 'scoped memory for tpu_custom_call.1']
    #allocation5 [shape = 'u8[32768]{0}', space=vmem, size = 0x8000, scoped, tag = 'input window, operand 1']
    #allocation6 [shape = 's32[2]{0}', space=sflag, size = 0x8, scoped, tag = 'scoped memory for tpu_custom_call.1']
    #allocation7 [shape = 'u8[16384]{0}', space=vmem, size = 0x4000, scoped, tag = 'output window, operand 0']
    %7 = vsyncpa [#allocation3], 0
    %8 = vsyncpa [#allocation6], 0
    %s9 = scalar_lea.sflag [#allocation6], 1
    %10 = vsyncpa %s9, 0
    %11 = vsyncpa [#allocation4], 0
    %s12 = scalar_lea.sflag [#allocation4], 1
    %13 = vsyncpa %s12, 0
    loop: start=0, step=1, limit=4
    $region2: #{tpu_custom_call.1} parent=1 // loop_pre_header
      _
    $region3: #{tpu_custom_call.1} parent=1 // loop_header
      %s15 = sphi 0, %s19
      %p16 = scmp.ge.s32.totalorder %s15, 4
      %s23 = sphi 0, %s23
      %s25 = sphi 0, %s23
      %s26 = sphi 0, %s25
      %s40 = sphi 0, %s26
      %s46 = sphi 0, %s48
      %s49 = sphi 0, %s46
      %s50 = sphi 0, %s49
      %s66 = sphi 0, %s50
      %s72 = sphi 0, %s74
      %s75 = sphi 0, %s72
      %s76 = sphi 0, %s75
      %s92 = sphi 0, %s76
    $region4: #{tpu_custom_call.1} parent=1 // loop_header_branch
      %18 = sbr.rel (%p16) target = $region8
    $region5: #{tpu_custom_call.1} parent=1 // loop_body
      %s20 = ssub.s32 %s15, 1
      %s21 = ssub.s32 %s15, 2
      %s22 = sadd.s32 %s15, 1
      %s24 = sadd.s32 %s23, 1
      %p27 = scmp.eq.s32.totalorder %s15, 1
      %p28 = scmp.ne.s32.totalorder %s23, %s25
      %p29 = scmp.eq.s32.totalorder %s15, 0
      %p30 = por %p28, %p29
      %p31 = scmp.ne.s32.totalorder %s23, %s25
      %p32 = scmp.eq.s32.totalorder %s20, 1
      %p33 = por %p31, %p32
      %p34 = scmp.ne.s32.totalorder %s25, %s26
      %p35 = scmp.eq.s32.totalorder %s20, 0
      %p36 = por %p34, %p35
      %p37 = scmp.ne.s32.totalorder %s25, %s26
      %p38 = scmp.eq.s32.totalorder %s21, 1
      %p39 = por %p37, %p38
      %p41 = scmp.ne.s32.totalorder %s26, %s40
      %p42 = scmp.eq.s32.totalorder %s21, 0
      %p43 = por %p41, %p42
      %s44 = ssub.s32 %s15, %s22
      %p45 = scmp.eq.s32.totalorder %s44, 0
      %s47 = sadd.s32 %s46, 1
      %s48 = scalar_select %p45, %s46, %s47
      %p51 = pneg %p45
      %p52 = scmp.eq.s32.totalorder %s15, 1
      %p53 = por %p51, %p52
      %p54 = scmp.ne.s32.totalorder %s46, %s49
      %p55 = scmp.eq.s32.totalorder %s15, 0
      %p56 = por %p54, %p55
      %p57 = scmp.ne.s32.totalorder %s46, %s49
      %p58 = scmp.eq.s32.totalorder %s20, 1
      %p59 = por %p57, %p58
      %p60 = scmp.ne.s32.totalorder %s49, %s50
      %p61 = scmp.eq.s32.totalorder %s20, 0
      %p62 = por %p60, %p61
      %p63 = scmp.ne.s32.totalorder %s49, %s50
      %p64 = scmp.eq.s32.totalorder %s21, 1
      %p65 = por %p63, %p64
      %p67 = scmp.ne.s32.totalorder %s50, %s66
      %p68 = scmp.eq.s32.totalorder %s21, 0
      %p69 = por %p67, %p68
      %s70 = ssub.s32 %s15, %s22
      %p71 = scmp.eq.s32.totalorder %s70, 0
      %s73 = sadd.s32 %s72, 1
      %s74 = scalar_select %p71, %s72, %s73
      %p77 = pneg %p71
      %p78 = scmp.eq.s32.totalorder %s15, 1
      %p79 = por %p77, %p78
      %p80 = scmp.ne.s32.totalorder %s72, %s75
      %p81 = scmp.eq.s32.totalorder %s15, 0
      %p82 = por %p80, %p81
      %p83 = scmp.ne.s32.totalorder %s72, %s75
      %p84 = scmp.eq.s32.totalorder %s20, 1
      %p85 = por %p83, %p84
      %p86 = scmp.ne.s32.totalorder %s75, %s76
      %p87 = scmp.eq.s32.totalorder %s20, 0
      %p88 = por %p86, %p87
      %p89 = scmp.ne.s32.totalorder %s75, %s76
      %p90 = scmp.eq.s32.totalorder %s21, 1
      %p91 = por %p89, %p90
      %p93 = scmp.ne.s32.totalorder %s76, %s92
      %p94 = scmp.eq.s32.totalorder %s21, 0
      %p95 = por %p93, %p94
      %p96 = scmp.le.s32.totalorder 1, %s15
      %p97 = scmp.lt.s32.totalorder %s15, 3
      %p98 = pnand %p96, %p97
      %p99 = pneg %p98
      // Predicated region
      $region9: #{tpu_custom_call.1} parent=5 // pred_check
        _
      $region10: #{tpu_custom_call.1} parent=5 // pred_check_branch
        %101 = sbr.rel (%p98) target = $region12
      $region11: #{tpu_custom_call.1} parent=5 // pred_region
        %s102 = ssub.s32 %s15, 1
        // Predicated region
        $region13: #{tpu_custom_call.1} parent=11 // pred_check
          %p103 = pneg %p36
        $region14: #{tpu_custom_call.1} parent=11 // pred_check_branch
          %105 = sbr.rel (%p103) target = $region16
        $region15: #{tpu_custom_call.1} parent=11 // pred_region
          %107 = vsyncadd [#allocation3], 0
          %s108 = sshll.u32 %s0, 4
          %s109 = int_to_ptr.hbm [resolvable:$true] %s108
          %s110 = sshll.u32 [#allocation2], 4
          %s111 = int_to_ptr.vmem [resolvable:$true] %s110
          %116 = dma.hbm_to_vmem [thread:$0]  %s109, 256, %s111, [#allocation3], 128, 128, 8
        $region16: #{tpu_custom_call.1} parent=11 // pred_fallthru
          _
      $region12: #{tpu_custom_call.1} parent=5 // pred_fallthru
        _
      %p117 = scmp.lt.s32.totalorder %s15, 2
      // Predicated region
      $region17: #{tpu_custom_call.1} parent=5 // pred_check
        %p118 = pneg %p117
      $region18: #{tpu_custom_call.1} parent=5 // pred_check_branch
        %120 = sbr.rel (%p118) target = $region20
      $region19: #{tpu_custom_call.1} parent=5 // pred_region
        // Predicated region
        $region21: #{tpu_custom_call.1} parent=19 // pred_check
          %p121 = pneg %p56
        $region22: #{tpu_custom_call.1} parent=19 // pred_check_branch
          %123 = sbr.rel (%p121) target = $region24
        $region23: #{tpu_custom_call.1} parent=19 // pred_region
          %s124 = sand.u32 %s46, 1
          %s125 = scalar_lea.sflag [#allocation6], %s124
          %s126 = sand.u32 %s46, 1
          %s127 = smul.addr %s126, 32
          %s128 = scalar_lea.vmem [#allocation5], %s127
          %130 = vsyncadd %s125, 0
          %s131 = smul.addr %s15, 8
          %s132 = scalar_lea.hbm %s1, %s131
          %s133 = sshll.u32 %s132, 4
          %s134 = int_to_ptr.hbm [resolvable:$true] %s133
          %s135 = sshll.u32 %s128, 4
          %s136 = int_to_ptr.vmem [resolvable:$true] %s135
          %141 = dma.hbm_to_vmem [thread:$0]  %s134, 512, %s136, %s125, 256, 128, 8
        $region24: #{tpu_custom_call.1} parent=19 // pred_fallthru
          _
      $region20: #{tpu_custom_call.1} parent=5 // pred_fallthru
        _
      %p142 = scmp.le.s32.totalorder 1, %s15
      %p143 = scmp.lt.s32.totalorder %s15, 3
      %p144 = pnand %p142, %p143
      %p145 = pneg %p144
      // Predicated region
      $region25: #{tpu_custom_call.1} parent=5 // pred_check
        _
      $region26: #{tpu_custom_call.1} parent=5 // pred_check_branch
        %147 = sbr.rel (%p144) target = $region28
      $region27: #{tpu_custom_call.1} parent=5 // pred_region
        %s148 = ssub.s32 %s15, 1
        // Predicated region
        $region29: #{tpu_custom_call.1} parent=27 // pred_check
          %p149 = pneg %p36
        $region30: #{tpu_custom_call.1} parent=27 // pred_check_branch
          %151 = sbr.rel (%p149) target = $region32
        $region31: #{tpu_custom_call.1} parent=27 // pred_region
          %153 = dma.done [#allocation3], 256
        $region32: #{tpu_custom_call.1} parent=27 // pred_fallthru
          _
        %s154 = sand.u32 %s49, 1
        %s155 = scalar_lea.sflag [#allocation6], %s154
        %s156 = sand.u32 %s49, 1
        %s157 = smul.addr %s156, 32
        %s158 = scalar_lea.vmem [#allocation5], %s157
        // Predicated region
        $region33: #{tpu_custom_call.1} parent=27 // pred_check
          %p159 = pneg %p62
        $region34: #{tpu_custom_call.1} parent=27 // pred_check_branch
          %161 = sbr.rel (%p159) target = $region36
        $region35: #{tpu_custom_call.1} parent=27 // pred_region
          %163 = dma.done %s155, 512
        $region36: #{tpu_custom_call.1} parent=27 // pred_fallthru
          _
        %p164 = pneg %p36
        %p165 = pneg %p33
        %s166 = sand.u32 %s49, 1
        %s167 = scalar_lea.sflag [#allocation6], %s166
        %s168 = sand.u32 %s49, 1
        %s169 = smul.addr %s168, 32
        %s170 = scalar_lea.vmem [#allocation5], %s169
        %p171 = pneg %p62
        %p172 = pneg %p59
        %p173 = pneg %p88
        %p174 = pneg %p85
        %s175 = sand.u32 %s75, 1
        %s176 = scalar_lea.sflag [#allocation4], %s175
        %s177 = sand.u32 %s75, 1
        %s178 = smul.addr %s177, 16
        %s179 = scalar_lea.vmem [#allocation7], %s178
        %v180 = vld [vmem:[#allocation2] sm:$0xff]
        %v181 = vld [vmem:[#allocation2 + $0x8] sm:$0xff]
        %v182 = vld [vmem:[%s158] sm:$0xff]
        %v183 = vld [vmem:[%s158 + $0x8] sm:$0xff]
        %v184 = vld [vmem:[%s158 + $0x10] sm:$0xff]
        %v185 = vld [vmem:[%s158 + $0x18] sm:$0xff]
        %vm186 = vcmask 261120
        %v188 = vsel %vm186, %v180, 0
        %v191 = vsel %vm186, %v181, 0
        %193 = vmatpush.msra.mxu0 0.0
        %194 = vmatpush.msra.mxu0 0.0
        %195 = vmatpush.msra.mxu0 0.0
        %196 = vmatpush.msra.mxu0 0.0
        %197 = vmatpush.msra.mxu0 0.0
        %198 = vmatpush.msra.mxu0 0.0
        %199 = vmatpush.msra.mxu0 0.0
        %200 = vmatpush.msra.mxu0 0.0
        %201 = vmatpush.msra.mxu0 0.0
        %202 = vmatpush.msra.mxu0 0.0
        %203 = vmatpush.msra.mxu0 0.0
        %204 = vmatpush.msra.mxu0 0.0
        %205 = vmatpush.msra.mxu0 %v185
        %206 = vmatpush.msra.mxu0 %v184
        %207 = vmatpush.msra.mxu0 %v183
        %208 = vmatpush.msra.mxu0 %v182
        %209 = vmatmul.f32.gmra.mxu0 %v188
        %v210 = vpop.f32.mrf.mxu0
        %v211 = vadd.f32 0.0, %v210
        %212 = vmatmul.f32.gmra.mxu0 %v191
        %v213 = vpop.f32.mrf.mxu0
        %v214 = vadd.f32 0.0, %v213
        %215 = vdwg.mxu0
        %216 = vst [vmem:[%s179] sm:$0xff] %v211
        %217 = vst [vmem:[%s179 + $0x8] sm:$0xff] %v214
        %s218 = sand.u32 %s75, 1
        %s219 = scalar_lea.sflag [#allocation4], %s218
        %s220 = sand.u32 %s75, 1
        %s221 = smul.addr %s220, 16
        %s222 = scalar_lea.vmem [#allocation7], %s221
        // Predicated region
        $region37: #{tpu_custom_call.1} parent=27 // pred_check
          %p223 = pneg %p85
        $region38: #{tpu_custom_call.1} parent=27 // pred_check_branch
          %225 = sbr.rel (%p223) target = $region40
        $region39: #{tpu_custom_call.1} parent=27 // pred_region
          %227 = vsyncadd %s219, 0
          %s228 = smul.addr %s20, 8
          %s229 = scalar_lea.hbm %s2, %s228
          %s230 = sshll.u32 %s222, 4
          %s231 = int_to_ptr.vmem [resolvable:$true] %s230
          %s232 = sshll.u32 %s229, 4
          %s233 = int_to_ptr.hbm [resolvable:$true] %s232
          %238 = dma.vmem_to_hbm [thread:$0]  %s231, 256, %s233, %s219, 128, 256, 8
        $region40: #{tpu_custom_call.1} parent=27 // pred_fallthru
          _
      $region28: #{tpu_custom_call.1} parent=5 // pred_fallthru
        _
      %p239 = scmp.le.s32.totalorder 2, %s15
      // Predicated region
      $region41: #{tpu_custom_call.1} parent=5 // pred_check
        %p240 = pneg %p239
      $region42: #{tpu_custom_call.1} parent=5 // pred_check_branch
        %242 = sbr.rel (%p240) target = $region44
      $region43: #{tpu_custom_call.1} parent=5 // pred_region
        %s243 = ssub.s32 %s15, 2
        // Predicated region
        $region45: #{tpu_custom_call.1} parent=43 // pred_check
          %p244 = pneg %p91
        $region46: #{tpu_custom_call.1} parent=43 // pred_check_branch
          %246 = sbr.rel (%p244) target = $region48
        $region47: #{tpu_custom_call.1} parent=43 // pred_region
          %s247 = sand.u32 %s76, 1
          %s248 = scalar_lea.sflag [#allocation4], %s247
          %s249 = sand.u32 %s76, 1
          %s250 = smul.addr %s249, 16
          %s251 = scalar_lea.vmem [#allocation7], %s250
          %253 = dma.done %s248, 256
        $region48: #{tpu_custom_call.1} parent=43 // pred_fallthru
          _
      $region44: #{tpu_custom_call.1} parent=5 // pred_fallthru
        _
    $region6: #{tpu_custom_call.1} parent=1 // loop_footer
      %s19 = sadd.s32 1, %s15
    $region7: #{tpu_custom_call.1} parent=1 // loop_footer_branch
      %14 = sbr.rel target = $region3
    $region8: #{tpu_custom_call.1} parent=1 // loop_exit
      _
    %254 = vsyncpa [#allocation3], 1
    %s255 = scalar_lea.sflag [#allocation3], 1
    %256 = vsyncpa %s255, 1
    %257 = vsyncpa [#allocation6], 1
    %s258 = scalar_lea.sflag [#allocation6], 1
    %259 = vsyncpa %s258, 1
    %260 = vsyncpa [#allocation4], 1
    %s261 = scalar_lea.sflag [#allocation4], 1
    %262 = vsyncpa %s261, 1

</llo_original>
